<compile_context>
chip_gen: v6e
topology: v6e:2x2x1
jax: 0.10.0
libtpu: 0.0.40
codegen_flags: <defaults>
</compile_context>

<pallas_src>
import math

import jax
import jax.numpy as jnp
from jax.experimental import pallas as pl
from jax.experimental.pallas import tpu as pltpu

NEG_SLOPE = 0.01   # nn.LeakyReLU default
BN_EPS = 1e-5      # nn.BatchNorm2d default


def _round_up(x, m):
    return ((x + m - 1) // m) * m


def _lane_round(n):
    return _round_up(n, 128)


def lbrd_kernel(x_ref, w_ref, t_ref, o_ref):
    """One row-tile of LBRD (BN scale pre-folded into w, shift in t).

    x_ref : (tmr, P*Cin)        packed input rows (native dtype, bf16 or f32)
    w_ref : (P*Cin, P*Cout)     block-diagonal, BN-scale-folded weight
    t_ref : (1, P*Cout)         folded BatchNorm shift (f32, tiled P times)
    o_ref : (tmr, P*Cout)       packed output rows (lane-dense when P*Cout%128==0)
    """
    y = jnp.dot(x_ref[...], w_ref[...], preferred_element_type=jnp.float32)
    y = y + t_ref[...]
    y = jnp.maximum(y, NEG_SLOPE * y)          # LeakyReLU, 0 < slope < 1
    o_ref[...] = y.astype(o_ref.dtype)


def lbrd_forward(x, conv_w, gamma, beta, running_mean, running_var,
                 *, tm_packed=8192, out_dtype=None,
                 max_weight_bytes=2 * 1024 * 1024,
                 vmem_block_budget=24 * 1024 * 1024):
    """LBRD forward (eval-mode BatchNorm, Dropout(0)=identity).

    x       : (B, N, M, Cin)  channels-last (layout BEFORE the module's permute)
    conv_w  : (Cout, Cin)     Conv2d(1x1, bias=False) weight (squeezed)
    gamma, beta, running_mean, running_var : (Cout,) BatchNorm2d parameters
    returns : (B, N, M, Cout)
    """
    # TODO(synk): training-mode BatchNorm (batch statistics) and Dropout p>0
    #             (RNG mask) are not implemented; this matches eval-mode / p=0.
    B, N, M, Cin = x.shape
    Cout, Cin_w = conv_w.shape
    assert Cin_w == Cin
    out_dtype = jnp.dtype(out_dtype or x.dtype)

    # Fold BN into scale/shift and the scale into the weight columns.
    s = (gamma / jnp.sqrt(running_var + BN_EPS)).astype(jnp.float32)
    t = (beta - running_mean * s).astype(jnp.float32)
    wt_s = conv_w.T.astype(jnp.float32) * s[None, :]            # (Cin, Cout)

    # Lane packing: make P*Cout a multiple of 128 (unmasked 128-lane stores),
    # capped so the block-diagonal weight stays small.
    pack = 128 // math.gcd(Cout, 128)
    if pack > 1 and (pack * Cin) * (pack * Cout) * 4 > max_weight_bytes:
        pack = 1

    # MXU operand dtype: bf16 is the fast native path; otherwise f32.
    mxu_dtype = jnp.bfloat16 if x.dtype == jnp.bfloat16 else jnp.float32

    # Block-diagonal weight (BN scale folded in) and tiled shift.
    wblk = jnp.kron(jnp.eye(pack, dtype=jnp.float32), wt_s).astype(mxu_dtype)
    tblk = jnp.tile(t, pack).reshape(1, pack * Cout)            # stays f32

    rows = B * N * M
    # Tiny pad (< pack rows) only when rows isn't a multiple of pack, so the
    # (rows, Cin) -> (rows/pack, pack*Cin) reshape is a free row-major view.
    rows_pk = _round_up(rows, pack)
    x2d = x.reshape(rows, Cin)
    if rows_pk > rows:
        x2d = jnp.pad(x2d, ((0, rows_pk - rows), (0, 0)))
    packed_rows = rows_pk // pack
    x_packed = x2d.reshape(packed_rows, pack * Cin).astype(mxu_dtype)

    # Row tile: multiple of 8; at least 2 grid steps when there is enough work
    # (v7x megacore); capped by tm_packed and a double-buffered VMEM budget
    # that accounts for the 128-lane padding of the narrow input block.
    in_bytes = jnp.dtype(mxu_dtype).itemsize
    out_bytes = out_dtype.itemsize
    per_row_bytes = (_lane_round(pack * Cin) * in_bytes
                     + _lane_round(pack * Cout) * out_bytes)
    tmr_cap = max(8, (vmem_block_budget // (2 * per_row_bytes)) // 8 * 8)

    tmr = _round_up(max(packed_rows, 1), 8)
    if packed_rows > 8:
        tmr = min(tmr, _round_up(-(-packed_rows // 2), 8))      # >= 2 steps
    tmr = min(tmr, tm_packed, tmr_cap)
    grid_m = -(-packed_rows // tmr)

    out_packed = pl.pallas_call(
        lbrd_kernel,
        out_shape=jax.ShapeDtypeStruct((packed_rows, pack * Cout), out_dtype),
        grid_spec=pltpu.PrefetchScalarGridSpec(
            num_scalar_prefetch=0,
            grid=(grid_m,),
            in_specs=[
                pl.BlockSpec((tmr, pack * Cin), lambda i: (i, 0)),
                pl.BlockSpec((pack * Cin, pack * Cout), lambda i: (0, 0)),
                pl.BlockSpec((1, pack * Cout), lambda i: (0, 0)),
            ],
            out_specs=pl.BlockSpec((tmr, pack * Cout), lambda i: (i, 0)),
        ),
        compiler_params=pltpu.CompilerParams(
            dimension_semantics=("parallel",),
            vmem_limit_bytes=32 * 1024 * 1024,
        ),
    )(x_packed, wblk, tblk)

    # Free row-major view back to (rows_pk, Cout); drop the tiny pack pad only
    # if it exists; reshape to the module's output layout.
    out2d = out_packed.reshape(rows_pk, Cout)
    if rows_pk > rows:
        out2d = out2d[:rows]
    return out2d.reshape(B, N, M, Cout)


def _reference(x, conv_w, gamma, beta, running_mean, running_var):
    """Plain-JAX reference of the same math (eval-mode BN, LeakyReLU)."""
    s = gamma / jnp.sqrt(running_var + BN_EPS)
    t = beta - running_mean * s
    h = jnp.einsum("bnmc,dc->bnmd", x.astype(jnp.float32),
                   conv_w.astype(jnp.float32))
    h = h * s + t
    return jnp.where(h >= 0, h, NEG_SLOPE * h)


if __name__ == "__main__":
    key = jax.random.PRNGKey(0)
    kx, kw, kg, kb, km, kv = jax.random.split(key, 6)

    # Small shapes consistent with the module's usage in PCT.
    B, N, M = 2, 8, 16
    dim_in, dim_out = 4, 32

    x = jax.random.normal(kx, (B, N, M, dim_in), jnp.float32)
    conv_w = jax.random.normal(kw, (dim_out, dim_in), jnp.float32) / jnp.sqrt(dim_in)
    gamma = 1.0 + 0.1 * jax.random.normal(kg, (dim_out,), jnp.float32)
    beta = 0.1 * jax.random.normal(kb, (dim_out,), jnp.float32)
    running_mean = 0.05 * jax.random.normal(km, (dim_out,), jnp.float32)
    running_var = jax.random.uniform(kv, (dim_out,), jnp.float32,
                                     minval=0.5, maxval=1.5)

    # 1) Main f32 test (rows divisible by pack, 2-step parallel grid).
    out = lbrd_forward(x, conv_w, gamma, beta, running_mean, running_var)
    out = jax.block_until_ready(out)
    ref = _reference(x, conv_w, gamma, beta, running_mean, running_var)
    assert out.shape == (B, N, M, dim_out)
    assert jnp.allclose(out, ref.astype(out.dtype), atol=1e-4, rtol=1e-4), \
        "mismatch vs reference (f32)"

    # 2) Ragged-shape test: rows not a multiple of pack, partial last block.
    xr = jax.random.normal(kx, (1, 3, 7, dim_in), jnp.float32)
    out_r = jax.block_until_ready(
        lbrd_forward(xr, conv_w, gamma, beta, running_mean, running_var))
    ref_r = _reference(xr, conv_w, gamma, beta, running_mean, running_var)
    assert out_r.shape == (1, 3, 7, dim_out)
    assert jnp.allclose(out_r, ref_r.astype(out_r.dtype), atol=1e-4, rtol=1e-4), \
        "mismatch vs reference (ragged)"

    # 3) bf16 path: native MXU operands, f32 accumulate, bf16 store.
    xb = x.astype(jnp.bfloat16)
    out_b = jax.block_until_ready(
        lbrd_forward(xb, conv_w, gamma, beta, running_mean, running_var))
    ref_b = _reference(x, conv_w, gamma, beta, running_mean, running_var)
    assert out_b.dtype == jnp.bfloat16
    assert jnp.allclose(out_b.astype(jnp.float32), ref_b, atol=1e-1, rtol=1e-1), \
        "mismatch vs reference (bf16)"

    print("KERNEL_OK")
</pallas_src>

<mosaic_0001>
module attributes {stable_mosaic.version = 11 : i64} {
  func.func @lbrd_kernel(%arg0: i32, %arg1: memref<32x16xf32, #tpu.memory_space<vmem>>, %arg2: memref<16x128xf32, #tpu.memory_space<vmem>>, %arg3: memref<1x128xf32, #tpu.memory_space<vmem>>, %arg4: memref<32x128xf32, #tpu.memory_space<vmem>>) attributes {dimension_semantics = [#tpu.dimension_semantics<parallel>], iteration_bounds = array<i64: 2>, scalar_prefetch = 0 : i64, scratch_operands = 0 : i64, tpu.core_type = #tpu.core_type<tc>, window_params = [{transform_indices = @transform_0, window_bounds = array<i64: 32, 16>}, {pipeline_mode = #tpu.pipeline_mode<synchronous>, transform_indices = @transform_1, window_bounds = array<i64: 16, 128>}, {pipeline_mode = #tpu.pipeline_mode<synchronous>, transform_indices = @transform_2, window_bounds = array<i64: 1, 128>}, {transform_indices = @transform_3, window_bounds = array<i64: 32, 128>}]} {
    %c0 = arith.constant 0 : index
    %c0_0 = arith.constant 0 : index
    %0 = vector.load %arg1[%c0, %c0_0] : memref<32x16xf32, #tpu.memory_space<vmem>>, vector<32x16xf32>
    %c0_1 = arith.constant 0 : index
    %c0_2 = arith.constant 0 : index
    %1 = vector.load %arg2[%c0_1, %c0_2] : memref<16x128xf32, #tpu.memory_space<vmem>>, vector<16x128xf32>
    %cst = arith.constant dense<0.000000e+00> : vector<32x128xf32>
    %2 = tpu.matmul %0, %1, %cst {dimension_numbers = #tpu.dot_dimension_numbers<[1], [0], [0], [1], [0, 0, 1, 1], [], []>} : vector<32x16xf32>, vector<16x128xf32>, vector<32x128xf32> -> vector<32x128xf32>
    %c0_3 = arith.constant 0 : index
    %c0_4 = arith.constant 0 : index
    %3 = vector.load %arg3[%c0_3, %c0_4] : memref<1x128xf32, #tpu.memory_space<vmem>>, vector<1x128xf32>
    %4 = vector.broadcast %3 : vector<1x128xf32> to vector<32x128xf32>
    %5 = arith.addf %2, %4 : vector<32x128xf32>
    %cst_5 = arith.constant 0.00999999977 : f32
    %6 = vector.broadcast %cst_5 : f32 to vector<32x128xf32>
    %7 = arith.mulf %6, %5 : vector<32x128xf32>
    %8 = arith.maximumf %5, %7 : vector<32x128xf32>
    %c0_6 = arith.constant 0 : index
    %c0_7 = arith.constant 0 : index
    %9 = vector.load %arg4[%c0_6, %c0_7] : memref<32x128xf32, #tpu.memory_space<vmem>>, vector<32x128xf32>
    tpu.vector_store %arg4[%c0_6, %c0_7], %8 {strides = array<i32>} : memref<32x128xf32, #tpu.memory_space<vmem>>, vector<32x128xf32>,
    return
  }
  func.func @transform_0(%arg0: i32) -> (i32, i32) {
    %c0_i32 = arith.constant 0 : i32
    %c0_i32_0 = arith.constant 0 : i32
    return %arg0, %c0_i32 : i32, i32
  }
  func.func @transform_1(%arg0: i32) -> (i32, i32) {
    %c0_i32 = arith.constant 0 : i32
    %c0_i32_0 = arith.constant 0 : i32
    %c0_i32_1 = arith.constant 0 : i32
    return %c0_i32, %c0_i32_0 : i32, i32
  }
  func.func @transform_2(%arg0: i32) -> (i32, i32) {
    %c0_i32 = arith.constant 0 : i32
    %c0_i32_0 = arith.constant 0 : i32
    %c0_i32_1 = arith.constant 0 : i32
    return %c0_i32, %c0_i32_0 : i32, i32
  }
  func.func @transform_3(%arg0: i32) -> (i32, i32) {
    %c0_i32 = arith.constant 0 : i32
    %c0_i32_0 = arith.constant 0 : i32
    return %arg0, %c0_i32 : i32, i32
  }
}

</mosaic_0001>

<llo_original>
// kernel: tpu_custom_call.1
$region0: #{tpu_custom_call.1}
  #allocation0 [shape = 'u32[]', space=smem, size = 0x4, offset = 0x4, fixed_abs, tag = 'smem constant byte address 0x4 - core index']
  #allocation1 [shape = 'u32[144,128]{1,0:T(1,128)}', space=vmem, size = 0x12000, scoped, tag = 'internal scratch']
  %s0 = inlined_call_operand.vmem [shape: f32[64,16], index: 0, kind: input, shape index: {}]
  %s1 = inlined_call_operand.vmem [shape: f32[16,128], index: 1, kind: input, shape index: {}]
  %s2 = inlined_call_operand.vmem [shape: f32[1,128], index: 2, kind: input, shape index: {}]
  %s3 = inlined_call_operand.hbm [shape: f32[64,128], index: 3, kind: output, shape index: {}]
  %s4 = sld [smem:[#allocation0]]
  $region45: #{tpu_custom_call.1} parent=0
    _
  %s6 = ssub.s32 1, %s4
  %s7 = scalar_select 0, %s6, %s4
  $region1: #{tpu_custom_call.1} parent=0
    #allocation2 [shape = 'u8[32768]{0}', space=vmem, size = 0x8000, scoped, tag = 'output window, operand 0']
    #allocation3 [shape = 's32[2]{0}', space=sflag, size = 0x8, scoped, tag = 'scoped memory for tpu_custom_call.1']
    %8 = vsyncpa [#allocation3], 0
    %s9 = scalar_lea.sflag [#allocation3], 1
    %10 = vsyncpa %s9, 0
    loop: start=0, step=1, limit=4
    $region2: #{tpu_custom_call.1} parent=1 // loop_pre_header
      _
    $region3: #{tpu_custom_call.1} parent=1 // loop_header
      %s12 = sphi 0, %s16
      %p13 = scmp.ge.s32.totalorder %s12, 4
      %s22 = sphi 0, %s24
      %s25 = sphi 0, %s22
      %s26 = sphi 0, %s25
      %s42 = sphi 0, %s26
      %s46 = sphi 0, %s46
      %s48 = sphi 0, %s46
      %s49 = sphi 0, %s48
      %s63 = sphi 0, %s49
      %s67 = sphi 0, %s67
      %s69 = sphi 0, %s67
      %s70 = sphi 0, %s69
      %s84 = sphi 0, %s70
      %s90 = sphi 0, %s92
      %s93 = sphi 0, %s90
      %s94 = sphi 0, %s93
      %s110 = sphi 0, %s94
    $region4: #{tpu_custom_call.1} parent=1 // loop_header_branch
      %15 = sbr.rel (%p13) target = $region8
    $region5: #{tpu_custom_call.1} parent=1 // loop_body
      %s17 = ssub.s32 %s12, 1
      %s18 = ssub.s32 %s12, 2
      %s19 = sadd.s32 %s12, 1
      %s20 = ssub.s32 %s12, %s19
      %p21 = scmp.eq.s32.totalorder %s20, 0
      %s23 = sadd.s32 %s22, 1
      %s24 = scalar_select %p21, %s22, %s23
      %p27 = pneg %p21
      %p28 = scmp.eq.s32.totalorder %s12, 1
      %p29 = por %p27, %p28
      %p30 = scmp.ne.s32.totalorder %s22, %s25
      %p31 = scmp.eq.s32.totalorder %s12, 0
      %p32 = por %p30, %p31
      %p33 = scmp.ne.s32.totalorder %s22, %s25
      %p34 = scmp.eq.s32.totalorder %s17, 1
      %p35 = por %p33, %p34
      %p36 = scmp.ne.s32.totalorder %s25, %s26
      %p37 = scmp.eq.s32.totalorder %s17, 0
      %p38 = por %p36, %p37
      %p39 = scmp.ne.s32.totalorder %s25, %s26
      %p40 = scmp.eq.s32.totalorder %s18, 1
      %p41 = por %p39, %p40
      %p43 = scmp.ne.s32.totalorder %s26, %s42
      %p44 = scmp.eq.s32.totalorder %s18, 0
      %p45 = por %p43, %p44
      %s47 = sadd.s32 %s46, 1
      %p50 = scmp.eq.s32.totalorder %s12, 1
      %p51 = scmp.ne.s32.totalorder %s46, %s48
      %p52 = scmp.eq.s32.totalorder %s12, 0
      %p53 = por %p51, %p52
      %p54 = scmp.ne.s32.totalorder %s46, %s48
      %p55 = scmp.eq.s32.totalorder %s17, 1
      %p56 = por %p54, %p55
      %p57 = scmp.ne.s32.totalorder %s48, %s49
      %p58 = scmp.eq.s32.totalorder %s17, 0
      %p59 = por %p57, %p58
      %p60 = scmp.ne.s32.totalorder %s48, %s49
      %p61 = scmp.eq.s32.totalorder %s18, 1
      %p62 = por %p60, %p61
      %p64 = scmp.ne.s32.totalorder %s49, %s63
      %p65 = scmp.eq.s32.totalorder %s18, 0
      %p66 = por %p64, %p65
      %s68 = sadd.s32 %s67, 1
      %p71 = scmp.eq.s32.totalorder %s12, 1
      %p72 = scmp.ne.s32.totalorder %s67, %s69
      %p73 = scmp.eq.s32.totalorder %s12, 0
      %p74 = por %p72, %p73
      %p75 = scmp.ne.s32.totalorder %s67, %s69
      %p76 = scmp.eq.s32.totalorder %s17, 1
      %p77 = por %p75, %p76
      %p78 = scmp.ne.s32.totalorder %s69, %s70
      %p79 = scmp.eq.s32.totalorder %s17, 0
      %p80 = por %p78, %p79
      %p81 = scmp.ne.s32.totalorder %s69, %s70
      %p82 = scmp.eq.s32.totalorder %s18, 1
      %p83 = por %p81, %p82
      %p85 = scmp.ne.s32.totalorder %s70, %s84
      %p86 = scmp.eq.s32.totalorder %s18, 0
      %p87 = por %p85, %p86
      %s88 = ssub.s32 %s12, %s19
      %p89 = scmp.eq.s32.totalorder %s88, 0
      %s91 = sadd.s32 %s90, 1
      %s92 = scalar_select %p89, %s90, %s91
      %p95 = pneg %p89
      %p96 = scmp.eq.s32.totalorder %s12, 1
      %p97 = por %p95, %p96
      %p98 = scmp.ne.s32.totalorder %s90, %s93
      %p99 = scmp.eq.s32.totalorder %s12, 0
      %p100 = por %p98, %p99
      %p101 = scmp.ne.s32.totalorder %s90, %s93
      %p102 = scmp.eq.s32.totalorder %s17, 1
      %p103 = por %p101, %p102
      %p104 = scmp.ne.s32.totalorder %s93, %s94
      %p105 = scmp.eq.s32.totalorder %s17, 0
      %p106 = por %p104, %p105
      %p107 = scmp.ne.s32.totalorder %s93, %s94
      %p108 = scmp.eq.s32.totalorder %s18, 1
      %p109 = por %p107, %p108
      %p111 = scmp.ne.s32.totalorder %s94, %s110
      %p112 = scmp.eq.s32.totalorder %s18, 0
      %p113 = por %p111, %p112
      %p114 = scmp.le.s32.totalorder 1, %s12
      %p115 = scmp.lt.s32.totalorder %s12, 3
      %p116 = pnand %p114, %p115
      %p117 = pneg %p116
      // Predicated region
      $region9: #{tpu_custom_call.1} parent=5 // pred_check
        _
      $region10: #{tpu_custom_call.1} parent=5 // pred_check_branch
        %119 = sbr.rel (%p116) target = $region12
      $region11: #{tpu_custom_call.1} parent=5 // pred_region
        %s120 = ssub.s32 %s12, 1
        // Predicated region
        $region13: #{tpu_custom_call.1} parent=11 // pred_check
          %p121 = pneg %p59
        $region14: #{tpu_custom_call.1} parent=11 // pred_check_branch
          %123 = sbr.rel (%p121) target = $region16
        $region15: #{tpu_custom_call.1} parent=11 // pred_region
          _
        $region16: #{tpu_custom_call.1} parent=11 // pred_fallthru
          _
        // Predicated region
        $region17: #{tpu_custom_call.1} parent=11 // pred_check
          %p124 = pneg %p80
        $region18: #{tpu_custom_call.1} parent=11 // pred_check_branch
          %126 = sbr.rel (%p124) target = $region20
        $region19: #{tpu_custom_call.1} parent=11 // pred_region
          _
        $region20: #{tpu_custom_call.1} parent=11 // pred_fallthru
          _
      $region12: #{tpu_custom_call.1} parent=5 // pred_fallthru
        _
      %p127 = scmp.lt.s32.totalorder %s12, 2
      // Predicated region
      $region21: #{tpu_custom_call.1} parent=5 // pred_check
        %p128 = pneg %p127
      $region22: #{tpu_custom_call.1} parent=5 // pred_check_branch
        %130 = sbr.rel (%p128) target = $region24
      $region23: #{tpu_custom_call.1} parent=5 // pred_region
        // Predicated region
        $region25: #{tpu_custom_call.1} parent=23 // pred_check
          %p131 = pneg %p32
        $region26: #{tpu_custom_call.1} parent=23 // pred_check_branch
          %133 = sbr.rel (%p131) target = $region28
        $region27: #{tpu_custom_call.1} parent=23 // pred_region
          %s134 = smul.u32 4, %s12
          %p135 = scmp.lt.s32.totalorder %s134, 7
          %s136 = scalar_select %p135, %s134, 7
          %s137 = smul.addr %s136, 8
          %s138 = scalar_lea.vmem %s0, %s137
          %s139 = smul.u32 4, %s12
        $region28: #{tpu_custom_call.1} parent=23 // pred_fallthru
          _
      $region24: #{tpu_custom_call.1} parent=5 // pred_fallthru
        _
      %p140 = scmp.le.s32.totalorder 1, %s12
      %p141 = scmp.lt.s32.totalorder %s12, 3
      %p142 = pnand %p140, %p141
      %p143 = pneg %p142
      // Predicated region
      $region29: #{tpu_custom_call.1} parent=5 // pred_check
        _
      $region30: #{tpu_custom_call.1} parent=5 // pred_check_branch
        %145 = sbr.rel (%p142) target = $region32
      $region31: #{tpu_custom_call.1} parent=5 // pred_region
        %s146 = ssub.s32 %s12, 1
        %s147 = smul.u32 4, %s17
        %p148 = scmp.lt.s32.totalorder %s147, 7
        %s149 = scalar_select %p148, %s147, 7
        %s150 = smul.addr %s149, 8
        %s151 = scalar_lea.vmem %s0, %s150
        %p152 = pneg %p38
        %p153 = pneg %p35
        %p154 = pneg %p59
        %p155 = pneg %p56
        %p156 = pneg %p80
        %p157 = pneg %p77
        %p158 = pneg %p106
        %p159 = pneg %p103
        %s160 = sand.u32 %s93, 1
        %s161 = scalar_lea.sflag [#allocation3], %s160
        %s162 = sand.u32 %s93, 1
        %s163 = smul.addr %s162, 32
        %s164 = scalar_lea.vmem [#allocation2], %s163
        %s165 = smul.u32 4, %s17
        %p166 = scmp.lt.s32.totalorder %s165, 7
        %s167 = scalar_select %p166, %s165, 7
        %s168 = smul.addr %s167, 8
        %s169 = scalar_lea.vmem %s0, %s168
        %s170 = smul.u32 4, %s17
        %s171 = smul.u32 4, %s17
        %v172 = vld [vmem:[%s169] sm:$0xff]
        %v173 = vld [vmem:[%s169 + $0x8] sm:$0xff]
        %v174 = vld [vmem:[%s169 + $0x10] sm:$0xff]
        %v175 = vld [vmem:[%s169 + $0x18] sm:$0xff]
        %v176 = vld [vmem:[%s1] sm:$0xff]
        %v177 = vld [vmem:[%s1 + $0x8] sm:$0xff]
        %v178 = vld [vmem:[%s2] sm:$0x1]
        %v180 = vlaneseq
        %v181 = vshrl.u32 %v180, 7
        %v182 = vsub.s32 0, %v181
        %v183 = vrot.slane %v178, %v182
        %vm185 = vcmask 130048
        %v187 = vsel %vm185, %v172, 0
        %v190 = vsel %vm185, %v173, 0
        %v193 = vsel %vm185, %v174, 0
        %v196 = vsel %vm185, %v175, 0
        %198 = vmatprep.subr.mxu0 0.0
        %199 = vmatpush1.msra.mxu0 0.0
        %200 = vmatprep.subr.mxu0 0.0
        %201 = vmatpush1.msra.mxu0 0.0
        %202 = vmatprep.subr.mxu0 0.0
        %203 = vmatpush1.msra.mxu0 0.0
        %204 = vmatprep.subr.mxu0 0.0
        %205 = vmatpush1.msra.mxu0 0.0
        %206 = vmatprep.subr.mxu0 0.0
        %207 = vmatpush1.msra.mxu0 0.0
        %208 = vmatprep.subr.mxu0 0.0
        %209 = vmatpush1.msra.mxu0 0.0
        %210 = vmatprep.subr.mxu0 0.0
        %211 = vmatpush1.msra.mxu0 0.0
        %212 = vmatprep.subr.mxu0 0.0
        %213 = vmatpush1.msra.mxu0 0.0
        %214 = vmatprep.subr.mxu0 0.0
        %215 = vmatpush1.msra.mxu0 0.0
        %216 = vmatprep.subr.mxu0 0.0
        %217 = vmatpush1.msra.mxu0 0.0
        %218 = vmatprep.subr.mxu0 0.0
        %219 = vmatpush1.msra.mxu0 0.0
        %220 = vmatprep.subr.mxu0 0.0
        %221 = vmatpush1.msra.mxu0 0.0
        %222 = vmatprep.subr.mxu0 0.0
        %223 = vmatpush1.msra.mxu0 0.0
        %224 = vmatprep.subr.mxu0 0.0
        %225 = vmatpush1.msra.mxu0 0.0
        %226 = vmatprep.subr.mxu0 0.0
        %227 = vmatpush1.msra.mxu0 %v177
        %228 = vmatprep.subr.mxu0 0.0
        %229 = vmatpush1.msra.mxu0 %v176
        %230 = vmatprep.subr.mxu0 0.0
        %231 = vmatpush2.msra.mxu0 0.0
        %232 = vmatprep.subr.mxu0 0.0
        %233 = vmatpush2.msra.mxu0 0.0
        %234 = vmatprep.subr.mxu0 0.0
        %235 = vmatpush2.msra.mxu0 0.0
        %236 = vmatprep.subr.mxu0 0.0
        %237 = vmatpush2.msra.mxu0 0.0
        %238 = vmatprep.subr.mxu0 0.0
        %239 = vmatpush2.msra.mxu0 0.0
        %240 = vmatprep.subr.mxu0 0.0
        %241 = vmatpush2.msra.mxu0 0.0
        %242 = vmatprep.subr.mxu0 0.0
        %243 = vmatpush2.msra.mxu0 0.0
        %244 = vmatprep.subr.mxu0 0.0
        %245 = vmatpush2.msra.mxu0 0.0
        %246 = vmatprep.subr.mxu0 0.0
        %247 = vmatpush2.msra.mxu0 0.0
        %248 = vmatprep.subr.mxu0 0.0
        %249 = vmatpush2.msra.mxu0 0.0
        %250 = vmatprep.subr.mxu0 0.0
        %251 = vmatpush2.msra.mxu0 0.0
        %252 = vmatprep.subr.mxu0 0.0
        %253 = vmatpush2.msra.mxu0 0.0
        %254 = vmatprep.subr.mxu0 0.0
        %255 = vmatpush2.msra.mxu0 0.0
        %256 = vmatprep.subr.mxu0 0.0
        %257 = vmatpush2.msra.mxu0 0.0
        %258 = vmatprep.subr.mxu0 0.0
        %259 = vmatpush2.msra.mxu0 0.0
        %260 = vmatprep.subr.mxu0 0.0
        %261 = vmatpush2.msra.mxu0 0.0
        %262 = vmatprep.mubr.f32.mxu0 0.0
        %263 = vmatmul.mubr.f32.gmra.mxu0 %v187
        %v264 = vpop.f32.mrf.mxu0
        %v265 = vadd.f32 %v183, %v264
        %v266 = vpop.f32.mrf.mxu0
        %267 = vmatprep.mubr.f32.mxu0 0.0
        %268 = vmatmul.mubr.f32.gmra.mxu0 %v190
        %v269 = vpop.f32.mrf.mxu0
        %v270 = vadd.f32 %v183, %v269
        %v271 = vpop.f32.mrf.mxu0
        %272 = vmatprep.mubr.f32.mxu0 0.0
        %273 = vmatmul.mubr.f32.gmra.mxu0 %v193
        %v274 = vpop.f32.mrf.mxu0
        %v275 = vadd.f32 %v183, %v274
        %v276 = vpop.f32.mrf.mxu0
        %277 = vmatprep.mubr.f32.mxu0 0.0
        %278 = vmatmul.mubr.f32.gmra.mxu0 %v196
        %v279 = vpop.f32.mrf.mxu0
        %v280 = vadd.f32 %v183, %v279
        %v281 = vpop.f32.mrf.mxu0
        %282 = vdwg.mxu0
        %v283 = vmul.f32 %v265, 0.01
        %v284 = vmul.f32 %v270, 0.01
        %v285 = vmul.f32 %v275, 0.01
        %v286 = vmul.f32 %v280, 0.01
        %v287 = vmax.f32 %v265, %v283
        %v288 = vmax.f32 %v270, %v284
        %v289 = vmax.f32 %v275, %v285
        %v290 = vmax.f32 %v280, %v286
        %291 = vst [vmem:[%s164] sm:$0xff] %v287
        %292 = vst [vmem:[%s164 + $0x8] sm:$0xff] %v288
        %293 = vst [vmem:[%s164 + $0x10] sm:$0xff] %v289
        %294 = vst [vmem:[%s164 + $0x18] sm:$0xff] %v290
        %s295 = sand.u32 %s93, 1
        %s296 = scalar_lea.sflag [#allocation3], %s295
        %s297 = sand.u32 %s93, 1
        %s298 = smul.addr %s297, 32
        %s299 = scalar_lea.vmem [#allocation2], %s298
        // Predicated region
        $region33: #{tpu_custom_call.1} parent=31 // pred_check
          %p300 = pneg %p103
        $region34: #{tpu_custom_call.1} parent=31 // pred_check_branch
          %302 = sbr.rel (%p300) target = $region36
        $region35: #{tpu_custom_call.1} parent=31 // pred_region
          %s303 = smul.u32 4, %s17
          %s305 = ssub.s32 512, 512
          %306 = vsyncadd %s296, %s305
          %s307 = smul.addr %s303, 128
          %s308 = scalar_lea.hbm %s3, %s307
          %s309 = sshll.u32 %s299, 4
          %s310 = int_to_ptr.vmem [resolvable:$true] %s309
          %315 = dma.vmem_to_hbm [thread:$0]  %s310, 512, %s308, %s296, 128, 128, 8
        $region36: #{tpu_custom_call.1} parent=31 // pred_fallthru
          _
      $region32: #{tpu_custom_call.1} parent=5 // pred_fallthru
        _
      %p316 = scmp.le.s32.totalorder 2, %s12
      // Predicated region
      $region37: #{tpu_custom_call.1} parent=5 // pred_check
        %p317 = pneg %p316
      $region38: #{tpu_custom_call.1} parent=5 // pred_check_branch
        %319 = sbr.rel (%p317) target = $region40
      $region39: #{tpu_custom_call.1} parent=5 // pred_region
        %s320 = ssub.s32 %s12, 2
        // Predicated region
        $region41: #{tpu_custom_call.1} parent=39 // pred_check
          %p321 = pneg %p109
        $region42: #{tpu_custom_call.1} parent=39 // pred_check_branch
          %323 = sbr.rel (%p321) target = $region44
        $region43: #{tpu_custom_call.1} parent=39 // pred_region
          %s324 = sand.u32 %s94, 1
          %s325 = scalar_lea.sflag [#allocation3], %s324
          %s326 = sand.u32 %s94, 1
          %s327 = smul.addr %s326, 32
          %s328 = scalar_lea.vmem [#allocation2], %s327
          %329 = dma.done %s325, 512
        $region44: #{tpu_custom_call.1} parent=39 // pred_fallthru
          _
      $region40: #{tpu_custom_call.1} parent=5 // pred_fallthru
        _
    $region6: #{tpu_custom_call.1} parent=1 // loop_footer
      %s16 = sadd.s32 1, %s12
    $region7: #{tpu_custom_call.1} parent=1 // loop_footer_branch
      %11 = sbr.rel target = $region3
    $region8: #{tpu_custom_call.1} parent=1 // loop_exit
      _
    %330 = vsyncpa [#allocation3], 1
    %s331 = scalar_lea.sflag [#allocation3], 1
    %332 = vsyncpa %s331, 1

</llo_original>
